<compile_context>
chip_gen: v6e
topology: v6e:2x2x1
jax: 0.10.0
libtpu: 0.0.40
codegen_flags: <defaults>
</compile_context>

<pallas_src>
import math

import jax
import jax.numpy as jnp
from jax.experimental import pallas as pl
from jax.experimental.pallas import tpu as pltpu


def _round_up(v, m):
    return ((v + m - 1) // m) * m


def _pick_tile(n, preferred):
    for t in (preferred, 512, 256, 128, 64, 32, 16, 8):
        if t <= n and n % t == 0:
            return t
    return n


# ----------------------------------------------------------------------------
# Kernel 1: feature projection (bf16 MXU matmuls, f32 accumulation)
#   h  = x @ Wpad          -> stored bf16, [n, hd_pad]  (lane-dense)
#   s  = h @ Acat          -> split into s_i [n, heads] and s_j [n, heads]
# ----------------------------------------------------------------------------
def _make_proj_kernel(heads):
    def kernel(x_ref, w_ref, acat_ref, h_ref, si_ref, sj_ref):
        xb = x_ref[...].astype(jnp.bfloat16)
        h = jnp.dot(xb, w_ref[...], preferred_element_type=jnp.float32)
        hb = h.astype(jnp.bfloat16)
        h_ref[...] = hb
        s = jnp.dot(hb, acat_ref[...], preferred_element_type=jnp.float32)
        si_ref[...] = s[:, :heads]
        sj_ref[...] = s[:, heads:]
    return kernel


def gat_project(x, w_pad, acat_pad, *, heads, tm):
    n, din = x.shape
    hd_pad = w_pad.shape[1]
    two_h = acat_pad.shape[1]
    return pl.pallas_call(
        _make_proj_kernel(heads),
        out_shape=(jax.ShapeDtypeStruct((n, hd_pad), jnp.bfloat16),
                   jax.ShapeDtypeStruct((n, heads), jnp.float32),
                   jax.ShapeDtypeStruct((n, heads), jnp.float32)),
        grid=(n // tm,),
        in_specs=[
            pl.BlockSpec((tm, din), lambda i: (i, 0)),
            pl.BlockSpec((din, hd_pad), lambda i: (0, 0)),
            pl.BlockSpec((hd_pad, two_h), lambda i: (0, 0)),
        ],
        out_specs=[
            pl.BlockSpec((tm, hd_pad), lambda i: (i, 0)),
            pl.BlockSpec((tm, heads), lambda i: (i, 0)),
            pl.BlockSpec((tm, heads), lambda i: (i, 0)),
        ],
        compiler_params=pltpu.CompilerParams(
            dimension_semantics=("parallel",),
            vmem_limit_bytes=32 * 1024 * 1024),
    )(x, w_pad, acat_pad)


# ----------------------------------------------------------------------------
# Kernel 2: masked attention softmax + aggregation (flash-style online softmax)
# heads are unrolled statically; the accumulator is lane-dense [tm, hd_pad].
# ----------------------------------------------------------------------------
def _make_attn_kernel(tm, tn, heads, dout, hd_pad, out_pad, concat,
                      negative_slope, apply_elu):
    hd = heads * dout

    def kernel(si_ref, sjt_ref, h_ref, adj_ref, bias_ref, out_ref,
               m_scr, l_scr, acc_scr):
        j = pl.program_id(1)

        @pl.when(j == 0)
        def _init():
            # Finite sentinel: garbage from all-masked tiles is washed out later
            # by the online-softmax correction exp(m_old - m_new) = 0.  Requires
            # every row to have >= 1 unmasked neighbour (self-loops guarantee it).
            m_scr[...] = jnp.full((heads, tm, 1), -1e30, jnp.float32)
            l_scr[...] = jnp.zeros((heads, tm, 1), jnp.float32)
            acc_scr[...] = jnp.zeros((tm, hd_pad), jnp.float32)

        # additive mask from the int8 adjacency tile (computed once per tile)
        mask_bias = jnp.where(adj_ref[...] > 0,
                              jnp.float32(0.0), jnp.float32(-1e30))   # [tm, tn]
        hb = h_ref[...]                                               # [tn, hd_pad] bf16
        si_all = si_ref[...]                                          # [tm, heads] f32
        acc_old = acc_scr[...]                                        # [tm, hd_pad] f32

        acc_parts = []
        for hh in range(heads):
            # attention logits: e[m, n] = a_i.h_i(row m) + a_j.h_j(col n)
            e = si_all[:, hh:hh + 1] + sjt_ref[hh:hh + 1, :]          # [tm, tn]
            e = jnp.where(e > 0, e, e * jnp.float32(negative_slope))  # leaky relu
            e = e + mask_bias

            # online softmax with deferred normalisation
            m_prev = m_scr[hh]                                        # [tm, 1]
            m_new = jnp.maximum(m_prev, jnp.max(e, axis=1, keepdims=True))
            corr = jnp.exp(m_prev - m_new)
            p = jnp.exp(e - m_new)                                    # masked -> 0
            l_scr[hh] = corr * l_scr[hh] + jnp.sum(p, axis=1, keepdims=True)
            m_scr[hh] = m_new

            # weighted aggregation on the MXU (bf16 inputs, f32 accumulation)
            upd = jnp.dot(p.astype(jnp.bfloat16),
                          hb[:, hh * dout:(hh + 1) * dout],
                          preferred_element_type=jnp.float32)         # [tm, dout]
            acc_parts.append(corr * acc_old[:, hh * dout:(hh + 1) * dout] + upd)

        if hd_pad > hd:
            acc_parts.append(jnp.zeros((tm, hd_pad - hd), jnp.float32))
        acc_scr[...] = (jnp.concatenate(acc_parts, axis=1)
                        if len(acc_parts) > 1 else acc_parts[0])

        @pl.when(j == pl.num_programs(1) - 1)
        def _finalize():
            acc = acc_scr[...]                                        # [tm, hd_pad]
            z_parts = []
            for hh in range(heads):
                inv_l = pl.reciprocal(l_scr[hh], approx=True)         # [tm, 1]
                z_parts.append(acc[:, hh * dout:(hh + 1) * dout] * inv_l)
            if concat:
                if hd_pad > hd:
                    z_parts.append(jnp.zeros((tm, hd_pad - hd), jnp.float32))
                y = (jnp.concatenate(z_parts, axis=1)
                     if len(z_parts) > 1 else z_parts[0])             # [tm, out_pad]
            else:
                y = z_parts[0]
                for hh in range(1, heads):
                    y = y + z_parts[hh]
                y = y * jnp.float32(1.0 / heads)                      # mean over heads
                if out_pad > dout:
                    y = jnp.concatenate(
                        [y, jnp.zeros((tm, out_pad - dout), jnp.float32)], axis=1)
            y = y + bias_ref[...]
            if apply_elu:
                y = jnp.where(y > 0, y, jnp.expm1(jnp.minimum(y, 0.0)))
            out_ref[...] = y                                          # lane-dense slab

    return kernel


def gat_attention(si, sjt, h, adj, bias_pad, *, heads, dout, hd_pad, out_pad,
                  concat, apply_elu, negative_slope, tm, tn):
    n = adj.shape[0]
    assert n % tm == 0 and n % tn == 0, (n, tm, tn)
    kernel = _make_attn_kernel(tm, tn, heads, dout, hd_pad, out_pad, concat,
                               negative_slope, apply_elu)
    return pl.pallas_call(
        kernel,
        out_shape=jax.ShapeDtypeStruct((n, out_pad), jnp.float32),
        grid=(n // tm, n // tn),
        in_specs=[
            pl.BlockSpec((tm, heads), lambda i, j: (i, 0)),        # s_i (rows)
            pl.BlockSpec((heads, tn), lambda i, j: (0, j)),        # s_j^T (cols, lane-dense)
            pl.BlockSpec((tn, hd_pad), lambda i, j: (j, 0)),       # h (cols, bf16, lane-dense)
            pl.BlockSpec((tm, tn), lambda i, j: (i, j)),           # adj tile (int8)
            pl.BlockSpec((1, out_pad), lambda i, j: (0, 0)),       # bias (padded)
        ],
        out_specs=pl.BlockSpec((tm, out_pad), lambda i, j: (i, 0)),  # row-resident
        scratch_shapes=[
            pltpu.VMEM((heads, tm, 1), jnp.float32),   # running max
            pltpu.VMEM((heads, tm, 1), jnp.float32),   # running denom
            pltpu.VMEM((tm, hd_pad), jnp.float32),     # un-normalised output (packed)
        ],
        compiler_params=pltpu.CompilerParams(
            dimension_semantics=("parallel", "arbitrary"),
            vmem_limit_bytes=48 * 1024 * 1024),
    )(si, sjt, h, adj, bias_pad)


# ----------------------------------------------------------------------------
# One GATConv layer (+ optional ELU) built from the two kernels above.
# Takes / returns lane-dense padded slabs so hidden layers never get sliced.
# ----------------------------------------------------------------------------
def gat_conv_layer(x_pad, in_dim, adj, w, att, bias, *, heads, dout, concat,
                   apply_elu, negative_slope=0.2, tile_m=256, tile_n=256):
    n, x_width = x_pad.shape
    hd = heads * dout
    hd_pad = _round_up(hd, 128)
    out_dim = hd if concat else dout
    out_pad = _round_up(out_dim, 128)
    tm = _pick_tile(n, tile_m)
    tn = _pick_tile(n, tile_n)

    # W zero-padded to the (possibly padded) input width and to hd_pad columns:
    # consumes the previous layer's padded slab directly, free on the MXU.
    w_pad = (jnp.zeros((x_width, hd_pad), jnp.bfloat16)
             .at[:in_dim, :hd].set(w.astype(jnp.bfloat16)))

    # Block-diagonal attention-projection matrix so a.h becomes one MXU matmul.
    a_i = att[:, :dout]                                   # [heads, dout]
    a_j = att[:, dout:]                                   # [heads, dout]
    eye = jnp.eye(heads, dtype=jnp.float32)
    acat = jnp.concatenate(
        [(a_i[:, :, None] * eye[:, None, :]).reshape(hd, heads),
         (a_j[:, :, None] * eye[:, None, :]).reshape(hd, heads)], axis=1)
    acat_pad = (jnp.zeros((hd_pad, 2 * heads), jnp.float32)
                .at[:hd, :].set(acat).astype(jnp.bfloat16))

    h, s_i, s_j = gat_project(x_pad, w_pad, acat_pad, heads=heads, tm=tm)
    sjt = s_j.T                                           # [heads, n] (tiny transpose)

    bias_pad = jnp.zeros((1, out_pad), jnp.float32).at[0, :out_dim].set(bias)

    out = gat_attention(s_i, sjt, h, adj, bias_pad, heads=heads, dout=dout,
                        hd_pad=hd_pad, out_pad=out_pad, concat=concat,
                        apply_elu=apply_elu, negative_slope=negative_slope,
                        tm=tm, tn=tn)
    return out, out_dim                                   # padded slab + true width


# ----------------------------------------------------------------------------
# Parameter init (glorot / zeros, matching the PyTorch reset_parameters)
# ----------------------------------------------------------------------------
def _glorot(key, shape):
    stdv = math.sqrt(6.0 / (shape[-2] + shape[-1]))
    return jax.random.uniform(key, shape, jnp.float32, minval=-stdv, maxval=stdv)


def init_multigat_params(key, input_dim, hidden_dim, output_dim, num_layer, heads):
    if isinstance(heads, int):
        heads = [heads] * (num_layer - 1) + [1]
    params = []
    for i in range(num_layer - 1):
        din = input_dim if i == 0 else hidden_dim
        h = heads[i]
        dout = hidden_dim // h
        key, kw, ka = jax.random.split(key, 3)
        params.append(dict(
            w=_glorot(kw, (din, h * dout)),
            att=_glorot(ka, (h, 2 * dout)),
            bias=jnp.zeros((h * dout,), jnp.float32),
            heads=h, dout=dout, concat=True, apply_elu=True,
        ))
    din = input_dim if num_layer == 1 else hidden_dim
    h = heads[-1]
    key, kw, ka = jax.random.split(key, 3)
    params.append(dict(
        w=_glorot(kw, (din, h * output_dim)),
        att=_glorot(ka, (h, 2 * output_dim)),
        bias=jnp.zeros((output_dim,), jnp.float32),
        heads=h, dout=output_dim, concat=False, apply_elu=False,
    ))
    return params


# ----------------------------------------------------------------------------
# MultiGAT forward (inference: dropouts are identity)
# ----------------------------------------------------------------------------
# TODO(synk): input_dropout / att_dropout are identity here (eval-mode semantics).
def multigat_forward(x, adj, params, residual=False):
    out, out_dim = x, x.shape[1]
    for p in params[:-1]:
        identity, identity_dim = out, out_dim
        y, y_dim = gat_conv_layer(out, out_dim, adj, p["w"], p["att"], p["bias"],
                                  heads=p["heads"], dout=p["dout"],
                                  concat=p["concat"], apply_elu=p["apply_elu"])
        if residual and identity_dim == y_dim:
            if identity.shape[1] < y.shape[1]:
                identity = jnp.pad(
                    identity, ((0, 0), (0, y.shape[1] - identity.shape[1])))
            y = y + identity[:, :y.shape[1]]
        out, out_dim = y, y_dim
    p = params[-1]
    out, out_dim = gat_conv_layer(out, out_dim, adj, p["w"], p["att"], p["bias"],
                                  heads=p["heads"], dout=p["dout"],
                                  concat=p["concat"], apply_elu=p["apply_elu"])
    return out[:, :out_dim]                               # single final slice


def edge_index_to_dense_adj(edge_index, num_nodes, dtype=jnp.int8):
    """A[i, j] = 1 iff edge j -> i exists; self-loops re-added (GATConv semantics)."""
    src, dst = edge_index[0], edge_index[1]
    adj = jnp.zeros((num_nodes, num_nodes), jnp.float32)
    keep = (src != dst).astype(jnp.float32)
    adj = adj.at[dst, src].max(keep)
    diag = jnp.arange(num_nodes)
    adj = adj.at[diag, diag].set(1.0)
    return adj.astype(dtype)


# ----------------------------------------------------------------------------
# Pure-JAX reference (f32 everywhere) for a correctness check
# ----------------------------------------------------------------------------
def _gat_layer_ref(x, adj, w, att, bias, *, heads, dout, concat, apply_elu,
                   negative_slope=0.2):
    n = x.shape[0]
    h = x @ w
    h3 = h.reshape(n, heads, dout)
    si = jnp.einsum('nhd,hd->nh', h3, att[:, :dout])
    sj = jnp.einsum('nhd,hd->nh', h3, att[:, dout:])
    e = si[:, None, :] + sj[None, :, :]                   # [tgt, src, heads]
    e = jnp.where(e > 0, e, negative_slope * e)
    mask = (adj > 0)[:, :, None]
    e = jnp.where(mask, e, -1e30)
    p = jax.nn.softmax(e, axis=1)
    out = jnp.einsum('ijh,jhd->ihd', p, h3)
    y = out.reshape(n, heads * dout) if concat else out.mean(axis=1)
    y = y + bias
    if apply_elu:
        y = jnp.where(y > 0, y, jnp.expm1(jnp.minimum(y, 0.0)))
    return y


def multigat_reference(x, adj_f32, params, residual=False):
    out = x
    for p in params[:-1]:
        identity = out
        y = _gat_layer_ref(out, adj_f32, p["w"], p["att"], p["bias"],
                           heads=p["heads"], dout=p["dout"],
                           concat=p["concat"], apply_elu=p["apply_elu"])
        if residual and identity.shape[1] == y.shape[1]:
            y = y + identity
        out = y
    p = params[-1]
    return _gat_layer_ref(out, adj_f32, p["w"], p["att"], p["bias"],
                          heads=p["heads"], dout=p["dout"],
                          concat=p["concat"], apply_elu=p["apply_elu"])


# ----------------------------------------------------------------------------
# Demo
# ----------------------------------------------------------------------------
if __name__ == "__main__":
    N = 512           # 2 row tiles x 2 neighbour tiles at 256x256 attention tiles
    INPUT_DIM = 16
    HIDDEN_DIM = 32
    OUTPUT_DIM = 8
    NUM_LAYER = 2
    HEADS = 8         # hidden layer uses 8 heads, final layer uses 1 head

    key = jax.random.PRNGKey(0)
    kx, kp = jax.random.split(key)

    x = jax.random.normal(kx, (N, INPUT_DIM), jnp.float32)

    # deterministic ring graph (both directions): edge_index [2, E]
    src = jnp.concatenate([jnp.arange(N), (jnp.arange(N) + 1) % N])
    dst = jnp.concatenate([(jnp.arange(N) + 1) % N, jnp.arange(N)])
    edge_index = jnp.stack([src, dst], axis=0).astype(jnp.int32)

    adj = edge_index_to_dense_adj(edge_index, N)          # int8 mask

    params = init_multigat_params(kp, INPUT_DIM, HIDDEN_DIM, OUTPUT_DIM,
                                  NUM_LAYER, HEADS)

    out = multigat_forward(x, adj, params, residual=False)
    out = jax.block_until_ready(out)

    assert out.shape == (N, OUTPUT_DIM), out.shape
    assert bool(jnp.all(jnp.isfinite(out)))

    # bf16 MXU matmuls (projection + aggregation) and the approximate reciprocal
    # cost ~1e-2 absolute vs the all-f32 reference over two layers.
    ref = multigat_reference(x, adj.astype(jnp.float32), params, residual=False)
    err = float(jnp.max(jnp.abs(out - ref)))
    assert err < 1e-1, f"max abs err vs reference: {err}"

    print("KERNEL_OK")
</pallas_src>

<mosaic_0001>
module attributes {stable_mosaic.version = 11 : i64} {
  func.func @kernel(%arg0: i32, %arg1: memref<256x16xf32, #tpu.memory_space<vmem>>, %arg2: memref<16x128xbf16, #tpu.memory_space<vmem>>, %arg3: memref<128x16xbf16, #tpu.memory_space<vmem>>, %arg4: memref<256x128xbf16, #tpu.memory_space<vmem>>, %arg5: memref<256x8xf32, #tpu.memory_space<vmem>>, %arg6: memref<256x8xf32, #tpu.memory_space<vmem>>) attributes {dimension_semantics = [#tpu.dimension_semantics<parallel>], iteration_bounds = array<i64: 2>, scalar_prefetch = 0 : i64, scratch_operands = 0 : i64, tpu.core_type = #tpu.core_type<tc>, window_params = [{transform_indices = @transform_0, window_bounds = array<i64: 256, 16>}, {pipeline_mode = #tpu.pipeline_mode<synchronous>, transform_indices = @transform_1, window_bounds = array<i64: 16, 128>}, {pipeline_mode = #tpu.pipeline_mode<synchronous>, transform_indices = @transform_2, window_bounds = array<i64: 128, 16>}, {transform_indices = @transform_3, window_bounds = array<i64: 256, 128>}, {transform_indices = @transform_4, window_bounds = array<i64: 256, 8>}, {transform_indices = @transform_5, window_bounds = array<i64: 256, 8>}]} {
    %c0 = arith.constant 0 : index
    %c0_0 = arith.constant 0 : index
    %0 = vector.load %arg1[%c0, %c0_0] : memref<256x16xf32, #tpu.memory_space<vmem>>, vector<256x16xf32>
    %1 = arith.truncf %0 : vector<256x16xf32> to vector<256x16xbf16>
    %c0_1 = arith.constant 0 : index
    %c0_2 = arith.constant 0 : index
    %2 = vector.load %arg2[%c0_1, %c0_2] : memref<16x128xbf16, #tpu.memory_space<vmem>>, vector<16x128xbf16>
    %cst = arith.constant dense<0.000000e+00> : vector<256x128xf32>
    %3 = tpu.matmul %1, %2, %cst {dimension_numbers = #tpu.dot_dimension_numbers<[1], [0], [0], [1], [0, 0, 1, 1], [], []>} : vector<256x16xbf16>, vector<16x128xbf16>, vector<256x128xf32> -> vector<256x128xf32>
    %4 = arith.truncf %3 : vector<256x128xf32> to vector<256x128xbf16>
    %c0_3 = arith.constant 0 : index
    %c0_4 = arith.constant 0 : index
    %5 = vector.load %arg4[%c0_3, %c0_4] : memref<256x128xbf16, #tpu.memory_space<vmem>>, vector<256x128xbf16>
    tpu.vector_store %arg4[%c0_3, %c0_4], %4 {strides = array<i32>} : memref<256x128xbf16, #tpu.memory_space<vmem>>, vector<256x128xbf16>,
    %c0_5 = arith.constant 0 : index
    %c0_6 = arith.constant 0 : index
    %6 = vector.load %arg3[%c0_5, %c0_6] : memref<128x16xbf16, #tpu.memory_space<vmem>>, vector<128x16xbf16>
    %cst_7 = arith.constant dense<0.000000e+00> : vector<256x16xf32>
    %7 = tpu.matmul %4, %6, %cst_7 {dimension_numbers = #tpu.dot_dimension_numbers<[1], [0], [0], [1], [0, 0, 1, 1], [], []>} : vector<256x128xbf16>, vector<128x16xbf16>, vector<256x16xf32> -> vector<256x16xf32>
    %8 = vector.extract_strided_slice %7 {offsets = [0, 0], sizes = [256, 8], strides = [1, 1]} : vector<256x16xf32> to vector<256x8xf32>
    %c0_8 = arith.constant 0 : index
    %c0_9 = arith.constant 0 : index
    %9 = vector.load %arg5[%c0_8, %c0_9] : memref<256x8xf32, #tpu.memory_space<vmem>>, vector<256x8xf32>
    tpu.vector_store %arg5[%c0_8, %c0_9], %8 {strides = array<i32>} : memref<256x8xf32, #tpu.memory_space<vmem>>, vector<256x8xf32>,
    %10 = vector.extract_strided_slice %7 {offsets = [0, 8], sizes = [256, 8], strides = [1, 1]} : vector<256x16xf32> to vector<256x8xf32>
    %c0_10 = arith.constant 0 : index
    %c0_11 = arith.constant 0 : index
    %11 = vector.load %arg6[%c0_10, %c0_11] : memref<256x8xf32, #tpu.memory_space<vmem>>, vector<256x8xf32>
    tpu.vector_store %arg6[%c0_10, %c0_11], %10 {strides = array<i32>} : memref<256x8xf32, #tpu.memory_space<vmem>>, vector<256x8xf32>,
    return
  }
  func.func @transform_0(%arg0: i32) -> (i32, i32) {
    %c0_i32 = arith.constant 0 : i32
    %c0_i32_0 = arith.constant 0 : i32
    return %arg0, %c0_i32 : i32, i32
  }
  func.func @transform_1(%arg0: i32) -> (i32, i32) {
    %c0_i32 = arith.constant 0 : i32
    %c0_i32_0 = arith.constant 0 : i32
    %c0_i32_1 = arith.constant 0 : i32
    return %c0_i32, %c0_i32_0 : i32, i32
  }
  func.func @transform_2(%arg0: i32) -> (i32, i32) {
    %c0_i32 = arith.constant 0 : i32
    %c0_i32_0 = arith.constant 0 : i32
    %c0_i32_1 = arith.constant 0 : i32
    return %c0_i32, %c0_i32_0 : i32, i32
  }
  func.func @transform_3(%arg0: i32) -> (i32, i32) {
    %c0_i32 = arith.constant 0 : i32
    %c0_i32_0 = arith.constant 0 : i32
    return %arg0, %c0_i32 : i32, i32
  }
  func.func @transform_4(%arg0: i32) -> (i32, i32) {
    %c0_i32 = arith.constant 0 : i32
    %c0_i32_0 = arith.constant 0 : i32
    return %arg0, %c0_i32 : i32, i32
  }
  func.func @transform_5(%arg0: i32) -> (i32, i32) {
    %c0_i32 = arith.constant 0 : i32
    %c0_i32_0 = arith.constant 0 : i32
    return %arg0, %c0_i32 : i32, i32
  }
}

</mosaic_0001>

<llo_original>
// kernel: tpu_custom_call.1
$region0: #{tpu_custom_call.1}
  #allocation0 [shape = 'u32[]', space=smem, size = 0x4, offset = 0x4, fixed_abs, tag = 'smem constant byte address 0x4 - core index']
  #allocation1 [shape = 'u32[144,128]{1,0:T(1,128)}', space=vmem, size = 0x12000, scoped, tag = 'internal scratch']
  %s0 = inlined_call_operand.vmem [shape: f32[512,16], index: 0, kind: input, shape index: {}]
  %s1 = inlined_call_operand.vmem [shape: bf16[16,128], index: 1, kind: input, shape index: {}]
  %s2 = inlined_call_operand.vmem [shape: bf16[128,16], index: 2, kind: input, shape index: {}]
  %s3 = inlined_call_operand.hbm [shape: bf16[512,128], index: 3, kind: output, shape index: {0}]
  %s4 = inlined_call_operand.vmem [shape: f32[512,8], index: 4, kind: output, shape index: {1}]
  %s5 = inlined_call_operand.vmem [shape: f32[512,8], index: 5, kind: output, shape index: {2}]
  %6 = xla_tuple %s3, %s4, %s5
  %s7 = sld [smem:[#allocation0]]
  $region61: #{tpu_custom_call.1} parent=0
    _
  %s9 = ssub.s32 1, %s7
  %s10 = scalar_select 0, %s9, %s7
  $region1: #{tpu_custom_call.1} parent=0
    #allocation2 [shape = 'u8[131072]{0}', space=vmem, size = 0x20000, scoped, tag = 'output window, operand 0']
    #allocation3 [shape = 's32[2]{0}', space=sflag, size = 0x8, scoped, tag = 'scoped memory for tpu_custom_call.1']
    %11 = vsyncpa [#allocation3], 0
    %s12 = scalar_lea.sflag [#allocation3], 1
    %13 = vsyncpa %s12, 0
    loop: start=0, step=1, limit=4
    $region2: #{tpu_custom_call.1} parent=1 // loop_pre_header
      _
    $region3: #{tpu_custom_call.1} parent=1 // loop_header
      %s15 = sphi 0, %s19
      %p16 = scmp.ge.s32.totalorder %s15, 4
      %s25 = sphi 0, %s27
      %s28 = sphi 0, %s25
      %s29 = sphi 0, %s28
      %s45 = sphi 0, %s29
      %s49 = sphi 0, %s49
      %s51 = sphi 0, %s49
      %s52 = sphi 0, %s51
      %s66 = sphi 0, %s52
      %s70 = sphi 0, %s70
      %s72 = sphi 0, %s70
      %s73 = sphi 0, %s72
      %s87 = sphi 0, %s73
      %s93 = sphi 0, %s95
      %s96 = sphi 0, %s93
      %s97 = sphi 0, %s96
      %s113 = sphi 0, %s97
      %s119 = sphi 0, %s121
      %s122 = sphi 0, %s119
      %s123 = sphi 0, %s122
      %s139 = sphi 0, %s123
      %s145 = sphi 0, %s147
      %s148 = sphi 0, %s145
      %s149 = sphi 0, %s148
      %s165 = sphi 0, %s149
    $region4: #{tpu_custom_call.1} parent=1 // loop_header_branch
      %18 = sbr.rel (%p16) target = $region8
    $region5: #{tpu_custom_call.1} parent=1 // loop_body
      %s20 = ssub.s32 %s15, 1
      %s21 = ssub.s32 %s15, 2
      %s22 = sadd.s32 %s15, 1
      %s23 = ssub.s32 %s15, %s22
      %p24 = scmp.eq.s32.totalorder %s23, 0
      %s26 = sadd.s32 %s25, 1
      %s27 = scalar_select %p24, %s25, %s26
      %p30 = pneg %p24
      %p31 = scmp.eq.s32.totalorder %s15, 1
      %p32 = por %p30, %p31
      %p33 = scmp.ne.s32.totalorder %s25, %s28
      %p34 = scmp.eq.s32.totalorder %s15, 0
      %p35 = por %p33, %p34
      %p36 = scmp.ne.s32.totalorder %s25, %s28
      %p37 = scmp.eq.s32.totalorder %s20, 1
      %p38 = por %p36, %p37
      %p39 = scmp.ne.s32.totalorder %s28, %s29
      %p40 = scmp.eq.s32.totalorder %s20, 0
      %p41 = por %p39, %p40
      %p42 = scmp.ne.s32.totalorder %s28, %s29
      %p43 = scmp.eq.s32.totalorder %s21, 1
      %p44 = por %p42, %p43
      %p46 = scmp.ne.s32.totalorder %s29, %s45
      %p47 = scmp.eq.s32.totalorder %s21, 0
      %p48 = por %p46, %p47
      %s50 = sadd.s32 %s49, 1
      %p53 = scmp.eq.s32.totalorder %s15, 1
      %p54 = scmp.ne.s32.totalorder %s49, %s51
      %p55 = scmp.eq.s32.totalorder %s15, 0
      %p56 = por %p54, %p55
      %p57 = scmp.ne.s32.totalorder %s49, %s51
      %p58 = scmp.eq.s32.totalorder %s20, 1
      %p59 = por %p57, %p58
      %p60 = scmp.ne.s32.totalorder %s51, %s52
      %p61 = scmp.eq.s32.totalorder %s20, 0
      %p62 = por %p60, %p61
      %p63 = scmp.ne.s32.totalorder %s51, %s52
      %p64 = scmp.eq.s32.totalorder %s21, 1
      %p65 = por %p63, %p64
      %p67 = scmp.ne.s32.totalorder %s52, %s66
      %p68 = scmp.eq.s32.totalorder %s21, 0
      %p69 = por %p67, %p68
      %s71 = sadd.s32 %s70, 1
      %p74 = scmp.eq.s32.totalorder %s15, 1
      %p75 = scmp.ne.s32.totalorder %s70, %s72
      %p76 = scmp.eq.s32.totalorder %s15, 0
      %p77 = por %p75, %p76
      %p78 = scmp.ne.s32.totalorder %s70, %s72
      %p79 = scmp.eq.s32.totalorder %s20, 1
      %p80 = por %p78, %p79
      %p81 = scmp.ne.s32.totalorder %s72, %s73
      %p82 = scmp.eq.s32.totalorder %s20, 0
      %p83 = por %p81, %p82
      %p84 = scmp.ne.s32.totalorder %s72, %s73
      %p85 = scmp.eq.s32.totalorder %s21, 1
      %p86 = por %p84, %p85
      %p88 = scmp.ne.s32.totalorder %s73, %s87
      %p89 = scmp.eq.s32.totalorder %s21, 0
      %p90 = por %p88, %p89
      %s91 = ssub.s32 %s15, %s22
      %p92 = scmp.eq.s32.totalorder %s91, 0
      %s94 = sadd.s32 %s93, 1
      %s95 = scalar_select %p92, %s93, %s94
      %p98 = pneg %p92
      %p99 = scmp.eq.s32.totalorder %s15, 1
      %p100 = por %p98, %p99
      %p101 = scmp.ne.s32.totalorder %s93, %s96
      %p102 = scmp.eq.s32.totalorder %s15, 0
      %p103 = por %p101, %p102
      %p104 = scmp.ne.s32.totalorder %s93, %s96
      %p105 = scmp.eq.s32.totalorder %s20, 1
      %p106 = por %p104, %p105
      %p107 = scmp.ne.s32.totalorder %s96, %s97
      %p108 = scmp.eq.s32.totalorder %s20, 0
      %p109 = por %p107, %p108
      %p110 = scmp.ne.s32.totalorder %s96, %s97
      %p111 = scmp.eq.s32.totalorder %s21, 1
      %p112 = por %p110, %p111
      %p114 = scmp.ne.s32.totalorder %s97, %s113
      %p115 = scmp.eq.s32.totalorder %s21, 0
      %p116 = por %p114, %p115
      %s117 = ssub.s32 %s15, %s22
      %p118 = scmp.eq.s32.totalorder %s117, 0
      %s120 = sadd.s32 %s119, 1
      %s121 = scalar_select %p118, %s119, %s120
      %p124 = pneg %p118
      %p125 = scmp.eq.s32.totalorder %s15, 1
      %p126 = por %p124, %p125
      %p127 = scmp.ne.s32.totalorder %s119, %s122
      %p128 = scmp.eq.s32.totalorder %s15, 0
      %p129 = por %p127, %p128
      %p130 = scmp.ne.s32.totalorder %s119, %s122
      %p131 = scmp.eq.s32.totalorder %s20, 1
      %p132 = por %p130, %p131
      %p133 = scmp.ne.s32.totalorder %s122, %s123
      %p134 = scmp.eq.s32.totalorder %s20, 0
      %p135 = por %p133, %p134
      %p136 = scmp.ne.s32.totalorder %s122, %s123
      %p137 = scmp.eq.s32.totalorder %s21, 1
      %p138 = por %p136, %p137
      %p140 = scmp.ne.s32.totalorder %s123, %s139
      %p141 = scmp.eq.s32.totalorder %s21, 0
      %p142 = por %p140, %p141
      %s143 = ssub.s32 %s15, %s22
      %p144 = scmp.eq.s32.totalorder %s143, 0
      %s146 = sadd.s32 %s145, 1
      %s147 = scalar_select %p144, %s145, %s146
      %p150 = pneg %p144
      %p151 = scmp.eq.s32.totalorder %s15, 1
      %p152 = por %p150, %p151
      %p153 = scmp.ne.s32.totalorder %s145, %s148
      %p154 = scmp.eq.s32.totalorder %s15, 0
      %p155 = por %p153, %p154
      %p156 = scmp.ne.s32.totalorder %s145, %s148
      %p157 = scmp.eq.s32.totalorder %s20, 1
      %p158 = por %p156, %p157
      %p159 = scmp.ne.s32.totalorder %s148, %s149
      %p160 = scmp.eq.s32.totalorder %s20, 0
      %p161 = por %p159, %p160
      %p162 = scmp.ne.s32.totalorder %s148, %s149
      %p163 = scmp.eq.s32.totalorder %s21, 1
      %p164 = por %p162, %p163
      %p166 = scmp.ne.s32.totalorder %s149, %s165
      %p167 = scmp.eq.s32.totalorder %s21, 0
      %p168 = por %p166, %p167
      %p169 = scmp.le.s32.totalorder 1, %s15
      %p170 = scmp.lt.s32.totalorder %s15, 3
      %p171 = pnand %p169, %p170
      %p172 = pneg %p171
      // Predicated region
      $region9: #{tpu_custom_call.1} parent=5 // pred_check
        _
      $region10: #{tpu_custom_call.1} parent=5 // pred_check_branch
        %174 = sbr.rel (%p171) target = $region12
      $region11: #{tpu_custom_call.1} parent=5 // pred_region
        %s175 = ssub.s32 %s15, 1
        // Predicated region
        $region13: #{tpu_custom_call.1} parent=11 // pred_check
          %p176 = pneg %p62
        $region14: #{tpu_custom_call.1} parent=11 // pred_check_branch
          %178 = sbr.rel (%p176) target = $region16
        $region15: #{tpu_custom_call.1} parent=11 // pred_region
          _
        $region16: #{tpu_custom_call.1} parent=11 // pred_fallthru
          _
        // Predicated region
        $region17: #{tpu_custom_call.1} parent=11 // pred_check
          %p179 = pneg %p83
        $region18: #{tpu_custom_call.1} parent=11 // pred_check_branch
          %181 = sbr.rel (%p179) target = $region20
        $region19: #{tpu_custom_call.1} parent=11 // pred_region
          _
        $region20: #{tpu_custom_call.1} parent=11 // pred_fallthru
          _
      $region12: #{tpu_custom_call.1} parent=5 // pred_fallthru
        _
      %p182 = scmp.lt.s32.totalorder %s15, 2
      // Predicated region
      $region21: #{tpu_custom_call.1} parent=5 // pred_check
        %p183 = pneg %p182
      $region22: #{tpu_custom_call.1} parent=5 // pred_check_branch
        %185 = sbr.rel (%p183) target = $region24
      $region23: #{tpu_custom_call.1} parent=5 // pred_region
        // Predicated region
        $region25: #{tpu_custom_call.1} parent=23 // pred_check
          %p186 = pneg %p35
        $region26: #{tpu_custom_call.1} parent=23 // pred_check_branch
          %188 = sbr.rel (%p186) target = $region28
        $region27: #{tpu_custom_call.1} parent=23 // pred_region
          %s189 = smul.u32 32, %s15
          %p190 = scmp.lt.s32.totalorder %s189, 63
          %s191 = scalar_select %p190, %s189, 63
          %s192 = smul.addr %s191, 8
          %s193 = scalar_lea.vmem %s0, %s192
          %s194 = smul.u32 32, %s15
        $region28: #{tpu_custom_call.1} parent=23 // pred_fallthru
          _
      $region24: #{tpu_custom_call.1} parent=5 // pred_fallthru
        _
      %p195 = scmp.le.s32.totalorder 1, %s15
      %p196 = scmp.lt.s32.totalorder %s15, 3
      %p197 = pnand %p195, %p196
      %p198 = pneg %p197
      // Predicated region
      $region29: #{tpu_custom_call.1} parent=5 // pred_check
        _
      $region30: #{tpu_custom_call.1} parent=5 // pred_check_branch
        %200 = sbr.rel (%p197) target = $region32
      $region31: #{tpu_custom_call.1} parent=5 // pred_region
        %s201 = ssub.s32 %s15, 1
        %s202 = smul.u32 32, %s20
        %p203 = scmp.lt.s32.totalorder %s202, 63
        %s204 = scalar_select %p203, %s202, 63
        %s205 = smul.addr %s204, 8
        %s206 = scalar_lea.vmem %s0, %s205
        %p207 = pneg %p41
        %p208 = pneg %p38
        %p209 = pneg %p62
        %p210 = pneg %p59
        %p211 = pneg %p83
        %p212 = pneg %p80
        %p213 = pneg %p109
        %p214 = pneg %p106
        %s215 = sand.u32 %s96, 1
        %s216 = scalar_lea.sflag [#allocation3], %s215
        %s217 = sand.u32 %s96, 1
        %s218 = smul.addr %s217, 128
        %s219 = scalar_lea.vmem [#allocation2], %s218
        %p220 = pneg %p135
        %p221 = pneg %p132
        %s222 = smul.u32 32, %s20
        %p223 = scmp.lt.s32.totalorder %s222, 63
        %s224 = scalar_select %p223, %s222, 63
        %s225 = smul.addr %s224, 8
        %s226 = scalar_lea.vmem %s4, %s225
        %p227 = pneg %p161
        %p228 = pneg %p158
        %s229 = smul.u32 32, %s20
        %p230 = scmp.lt.s32.totalorder %s229, 63
        %s231 = scalar_select %p230, %s229, 63
        %s232 = smul.addr %s231, 8
        %s233 = scalar_lea.vmem %s5, %s232
        %s234 = smul.u32 32, %s20
        %p235 = scmp.lt.s32.totalorder %s234, 63
        %s236 = scalar_select %p235, %s234, 63
        %s237 = smul.addr %s236, 8
        %s238 = scalar_lea.vmem %s0, %s237
        %s239 = smul.u32 32, %s20
        %s240 = smul.u32 32, %s20
        %s241 = smul.u32 32, %s20
        %p242 = scmp.lt.s32.totalorder %s241, 63
        %s243 = scalar_select %p242, %s241, 63
        %s244 = smul.addr %s243, 8
        %s245 = scalar_lea.vmem %s4, %s244
        %s246 = smul.u32 32, %s20
        %s247 = smul.u32 32, %s20
        %p248 = scmp.lt.s32.totalorder %s247, 63
        %s249 = scalar_select %p248, %s247, 63
        %s250 = smul.addr %s249, 8
        %s251 = scalar_lea.vmem %s5, %s250
        %s252 = smul.u32 32, %s20
        %v254 = vld [vmem:[%s238] sm:$0xff]
        %v255 = vld [vmem:[%s238 + $0x8] sm:$0xff]
        %v256 = vld [vmem:[%s238 + $0x10] sm:$0xff]
        %v257 = vld [vmem:[%s238 + $0x18] sm:$0xff]
        %v258 = vld [vmem:[%s238 + $0x20] sm:$0xff]
        %v259 = vld [vmem:[%s238 + $0x28] sm:$0xff]
        %v260 = vld [vmem:[%s238 + $0x30] sm:$0xff]
        %v261 = vld [vmem:[%s238 + $0x38] sm:$0xff]
        %v262 = vld [vmem:[%s238 + $0x40] sm:$0xff]
        %v263 = vld [vmem:[%s238 + $0x48] sm:$0xff]
        %v264 = vld [vmem:[%s238 + $0x50] sm:$0xff]
        %v265 = vld [vmem:[%s238 + $0x58] sm:$0xff]
        %v266 = vld [vmem:[%s238 + $0x60] sm:$0xff]
        %v267 = vld [vmem:[%s238 + $0x68] sm:$0xff]
        %v268 = vld [vmem:[%s238 + $0x70] sm:$0xff]
        %v269 = vld [vmem:[%s238 + $0x78] sm:$0xff]
        %v270 = vld [vmem:[%s238 + $0x80] sm:$0xff]
        %v271 = vld [vmem:[%s238 + $0x88] sm:$0xff]
        %v272 = vld [vmem:[%s238 + $0x90] sm:$0xff]
        %v273 = vld [vmem:[%s238 + $0x98] sm:$0xff]
        %v274 = vld [vmem:[%s238 + $0xa0] sm:$0xff]
        %v275 = vld [vmem:[%s238 + $0xa8] sm:$0xff]
        %v276 = vld [vmem:[%s238 + $0xb0] sm:$0xff]
        %v277 = vld [vmem:[%s238 + $0xb8] sm:$0xff]
        %v278 = vld [vmem:[%s238 + $0xc0] sm:$0xff]
        %v279 = vld [vmem:[%s238 + $0xc8] sm:$0xff]
        %v280 = vld [vmem:[%s238 + $0xd0] sm:$0xff]
        %v281 = vld [vmem:[%s238 + $0xd8] sm:$0xff]
        %v282 = vld [vmem:[%s238 + $0xe0] sm:$0xff]
        %v283 = vld [vmem:[%s238 + $0xe8] sm:$0xff]
        %v284 = vld [vmem:[%s238 + $0xf0] sm:$0xff]
        %v285 = vld [vmem:[%s238 + $0xf8] sm:$0xff]
        %v286 = vpack.c.bf16 %v255, %v254
        %v287 = vpack.c.bf16 %v257, %v256
        %v288 = vpack.c.bf16 %v259, %v258
        %v289 = vpack.c.bf16 %v261, %v260
        %v290 = vpack.c.bf16 %v263, %v262
        %v291 = vpack.c.bf16 %v265, %v264
        %v292 = vpack.c.bf16 %v267, %v266
        %v293 = vpack.c.bf16 %v269, %v268
        %v294 = vpack.c.bf16 %v271, %v270
        %v295 = vpack.c.bf16 %v273, %v272
        %v296 = vpack.c.bf16 %v275, %v274
        %v297 = vpack.c.bf16 %v277, %v276
        %v298 = vpack.c.bf16 %v279, %v278
        %v299 = vpack.c.bf16 %v281, %v280
        %v300 = vpack.c.bf16 %v283, %v282
        %v301 = vpack.c.bf16 %v285, %v284
        %v302 = vld [vmem:[%s1] sm:$0xf]
        %v303 = vld [vmem:[%s1 + $0x4] sm:$0xf]
        %v306 = vunpack.c.l.b16 %v302
        %v307 = vunpack.c.l.b16 %v303
        %v308 = vpack.c.b16 %v307, %v306
        %vm310 = vcmask 130048
        %v312 = vsel %vm310, %v286, 0
        %v315 = vsel %vm310, %v287, 0
        %v318 = vsel %vm310, %v288, 0
        %v321 = vsel %vm310, %v289, 0
        %v324 = vsel %vm310, %v290, 0
        %v327 = vsel %vm310, %v291, 0
        %v330 = vsel %vm310, %v292, 0
        %v333 = vsel %vm310, %v293, 0
        %v336 = vsel %vm310, %v294, 0
        %v339 = vsel %vm310, %v295, 0
        %v342 = vsel %vm310, %v296, 0
        %v345 = vsel %vm310, %v297, 0
        %v348 = vsel %vm310, %v298, 0
        %v351 = vsel %vm310, %v299, 0
        %v354 = vsel %vm310, %v300, 0
        %v357 = vsel %vm310, %v301, 0
        %359 = vmatprep.subr.bf16.mxu0 0
        %360 = vmatpush1.bf16.msra.mxu0 0
        %361 = vmatprep.subr.bf16.mxu0 0
        %362 = vmatpush1.bf16.msra.mxu0 0
        %363 = vmatprep.subr.bf16.mxu0 0
        %364 = vmatpush1.bf16.msra.mxu0 0
        %365 = vmatprep.subr.bf16.mxu0 0
        %366 = vmatpush1.bf16.msra.mxu0 0
        %367 = vmatprep.subr.bf16.mxu0 0
        %368 = vmatpush1.bf16.msra.mxu0 0
        %369 = vmatprep.subr.bf16.mxu0 0
        %370 = vmatpush1.bf16.msra.mxu0 0
        %371 = vmatprep.subr.bf16.mxu0 0
        %372 = vmatpush1.bf16.msra.mxu0 0
        %373 = vmatprep.subr.bf16.mxu0 0
        %374 = vmatpush1.bf16.msra.mxu0 %v308
        %375 = vmatprep.subr.bf16.mxu0 0
        %376 = vmatpush2.bf16.msra.mxu0 0
        %377 = vmatprep.subr.bf16.mxu0 0
        %378 = vmatpush2.bf16.msra.mxu0 0
        %379 = vmatprep.subr.bf16.mxu0 0
        %380 = vmatpush2.bf16.msra.mxu0 0
        %381 = vmatprep.subr.bf16.mxu0 0
        %382 = vmatpush2.bf16.msra.mxu0 0
        %383 = vmatprep.subr.bf16.mxu0 0
        %384 = vmatpush2.bf16.msra.mxu0 0
        %385 = vmatprep.subr.bf16.mxu0 0
        %386 = vmatpush2.bf16.msra.mxu0 0
        %387 = vmatprep.subr.bf16.mxu0 0
        %388 = vmatpush2.bf16.msra.mxu0 0
        %389 = vmatprep.subr.bf16.mxu0 0
        %390 = vmatpush2.bf16.msra.mxu0 0
        %391 = vmatprep.mubr.bf16.mxu0 0
        %392 = vmatmul.mubr.bf16.gmra.mxu0 %v312
        %v393 = vpop.f32.mrf.mxu0
        %v394 = vadd.f32 0.0, %v393
        %v395 = vpop.f32.mrf.mxu0
        %v396 = vpop.f32.mrf.mxu0
        %v397 = vadd.f32 0.0, %v396
        %v398 = vpop.f32.mrf.mxu0
        %399 = vmatprep.mubr.bf16.mxu0 0
        %400 = vmatmul.mubr.bf16.gmra.mxu0 %v315
        %v401 = vpop.f32.mrf.mxu0
        %v402 = vadd.f32 0.0, %v401
        %v403 = vpop.f32.mrf.mxu0
        %v404 = vpop.f32.mrf.mxu0
        %v405 = vadd.f32 0.0, %v404
        %v406 = vpop.f32.mrf.mxu0
        %407 = vmatprep.mubr.bf16.mxu0 0
        %408 = vmatmul.mubr.bf16.gmra.mxu0 %v318
        %v409 = vpop.f32.mrf.mxu0
        %v410 = vadd.f32 0.0, %v409
        %v411 = vpop.f32.mrf.mxu0
        %v412 = vpop.f32.mrf.mxu0
        %v413 = vadd.f32 0.0, %v412
        %v414 = vpop.f32.mrf.mxu0
        %415 = vmatprep.mubr.bf16.mxu0 0
        %416 = vmatmul.mubr.bf16.gmra.mxu0 %v321
        %v417 = vpop.f32.mrf.mxu0
        %v418 = vadd.f32 0.0, %v417
        %v419 = vpop.f32.mrf.mxu0
        %v420 = vpop.f32.mrf.mxu0
        %v421 = vadd.f32 0.0, %v420
        %v422 = vpop.f32.mrf.mxu0
        %423 = vmatprep.mubr.bf16.mxu0 0
        %424 = vmatmul.mubr.bf16.gmra.mxu0 %v324
        %v425 = vpop.f32.mrf.mxu0
        %v426 = vadd.f32 0.0, %v425
        %v427 = vpop.f32.mrf.mxu0
        %v428 = vpop.f32.mrf.mxu0
        %v429 = vadd.f32 0.0, %v428
        %v430 = vpop.f32.mrf.mxu0
        %431 = vmatprep.mubr.bf16.mxu0 0
        %432 = vmatmul.mubr.bf16.gmra.mxu0 %v327
        %v433 = vpop.f32.mrf.mxu0
        %v434 = vadd.f32 0.0, %v433
        %v435 = vpop.f32.mrf.mxu0
        %v436 = vpop.f32.mrf.mxu0
        %v437 = vadd.f32 0.0, %v436
        %v438 = vpop.f32.mrf.mxu0
        %439 = vmatprep.mubr.bf16.mxu0 0
        %440 = vmatmul.mubr.bf16.gmra.mxu0 %v330
        %v441 = vpop.f32.mrf.mxu0
        %v442 = vadd.f32 0.0, %v441
        %v443 = vpop.f32.mrf.mxu0
        %v444 = vpop.f32.mrf.mxu0
        %v445 = vadd.f32 0.0, %v444
        %v446 = vpop.f32.mrf.mxu0
        %447 = vmatprep.mubr.bf16.mxu0 0
        %448 = vmatmul.mubr.bf16.gmra.mxu0 %v333
        %v449 = vpop.f32.mrf.mxu0
        %v450 = vadd.f32 0.0, %v449
        %v451 = vpop.f32.mrf.mxu0
        %v452 = vpop.f32.mrf.mxu0
        %v453 = vadd.f32 0.0, %v452
        %v454 = vpop.f32.mrf.mxu0
        %455 = vmatprep.mubr.bf16.mxu0 0
        %456 = vmatmul.mubr.bf16.gmra.mxu0 %v336
        %v457 = vpop.f32.mrf.mxu0
        %v458 = vadd.f32 0.0, %v457
        %v459 = vpop.f32.mrf.mxu0
        %v460 = vpop.f32.mrf.mxu0
        %v461 = vadd.f32 0.0, %v460
        %v462 = vpop.f32.mrf.mxu0
        %463 = vmatprep.mubr.bf16.mxu0 0
        %464 = vmatmul.mubr.bf16.gmra.mxu0 %v339
        %v465 = vpop.f32.mrf.mxu0
        %v466 = vadd.f32 0.0, %v465
        %v467 = vpop.f32.mrf.mxu0
        %v468 = vpop.f32.mrf.mxu0
        %v469 = vadd.f32 0.0, %v468
        %v470 = vpop.f32.mrf.mxu0
        %471 = vmatprep.mubr.bf16.mxu0 0
        %472 = vmatmul.mubr.bf16.gmra.mxu0 %v342
        %v473 = vpop.f32.mrf.mxu0
        %v474 = vadd.f32 0.0, %v473
        %v475 = vpop.f32.mrf.mxu0
        %v476 = vpop.f32.mrf.mxu0
        %v477 = vadd.f32 0.0, %v476
        %v478 = vpop.f32.mrf.mxu0
        %479 = vmatprep.mubr.bf16.mxu0 0
        %480 = vmatmul.mubr.bf16.gmra.mxu0 %v345
        %v481 = vpop.f32.mrf.mxu0
        %v482 = vadd.f32 0.0, %v481
        %v483 = vpop.f32.mrf.mxu0
        %v484 = vpop.f32.mrf.mxu0
        %v485 = vadd.f32 0.0, %v484
        %v486 = vpop.f32.mrf.mxu0
        %487 = vmatprep.mubr.bf16.mxu0 0
        %488 = vmatmul.mubr.bf16.gmra.mxu0 %v348
        %v489 = vpop.f32.mrf.mxu0
        %v490 = vadd.f32 0.0, %v489
        %v491 = vpop.f32.mrf.mxu0
        %v492 = vpop.f32.mrf.mxu0
        %v493 = vadd.f32 0.0, %v492
        %v494 = vpop.f32.mrf.mxu0
        %495 = vmatprep.mubr.bf16.mxu0 0
        %496 = vmatmul.mubr.bf16.gmra.mxu0 %v351
        %v497 = vpop.f32.mrf.mxu0
        %v498 = vadd.f32 0.0, %v497
        %v499 = vpop.f32.mrf.mxu0
        %v500 = vpop.f32.mrf.mxu0
        %v501 = vadd.f32 0.0, %v500
        %v502 = vpop.f32.mrf.mxu0
        %503 = vmatprep.mubr.bf16.mxu0 0
        %504 = vmatmul.mubr.bf16.gmra.mxu0 %v354
        %v505 = vpop.f32.mrf.mxu0
        %v506 = vadd.f32 0.0, %v505
        %v507 = vpop.f32.mrf.mxu0
        %v508 = vpop.f32.mrf.mxu0
        %v509 = vadd.f32 0.0, %v508
        %v510 = vpop.f32.mrf.mxu0
        %511 = vmatprep.mubr.bf16.mxu0 0
        %512 = vmatmul.mubr.bf16.gmra.mxu0 %v357
        %v513 = vpop.f32.mrf.mxu0
        %v514 = vadd.f32 0.0, %v513
        %v515 = vpop.f32.mrf.mxu0
        %v516 = vpop.f32.mrf.mxu0
        %v517 = vadd.f32 0.0, %v516
        %v518 = vpop.f32.mrf.mxu0
        %519 = vdwg.mxu0
        %v520 = vpack.c.bf16 %v397, %v394
        %v521 = vpack.c.bf16 %v405, %v402
        %v522 = vpack.c.bf16 %v413, %v410
        %v523 = vpack.c.bf16 %v421, %v418
        %v524 = vpack.c.bf16 %v429, %v426
        %v525 = vpack.c.bf16 %v437, %v434
        %v526 = vpack.c.bf16 %v445, %v442
        %v527 = vpack.c.bf16 %v453, %v450
        %v528 = vpack.c.bf16 %v461, %v458
        %v529 = vpack.c.bf16 %v469, %v466
        %v530 = vpack.c.bf16 %v477, %v474
        %v531 = vpack.c.bf16 %v485, %v482
        %v532 = vpack.c.bf16 %v493, %v490
        %v533 = vpack.c.bf16 %v501, %v498
        %v534 = vpack.c.bf16 %v509, %v506
        %v535 = vpack.c.bf16 %v517, %v514
        %v552 = vunpack.c.l.b16 %v520
        %v553 = vunpack.c.h.b16 %v520
        %v554 = vunpack.c.l.b16 %v521
        %v555 = vunpack.c.h.b16 %v521
        %v556 = vunpack.c.l.b16 %v522
        %v557 = vunpack.c.h.b16 %v522
        %v558 = vunpack.c.l.b16 %v523
        %v559 = vunpack.c.h.b16 %v523
        %v560 = vunpack.c.l.b16 %v524
        %v561 = vunpack.c.h.b16 %v524
        %v562 = vunpack.c.l.b16 %v525
        %v563 = vunpack.c.h.b16 %v525
        %v564 = vunpack.c.l.b16 %v526
        %v565 = vunpack.c.h.b16 %v526
        %v566 = vunpack.c.l.b16 %v527
        %v567 = vunpack.c.h.b16 %v527
        %v568 = vunpack.c.l.b16 %v528
        %v569 = vunpack.c.h.b16 %v528
        %v570 = vunpack.c.l.b16 %v529
        %v571 = vunpack.c.h.b16 %v529
        %v572 = vunpack.c.l.b16 %v530
        %v573 = vunpack.c.h.b16 %v530
        %v574 = vunpack.c.l.b16 %v531
        %v575 = vunpack.c.h.b16 %v531
        %v576 = vunpack.c.l.b16 %v532
        %v577 = vunpack.c.h.b16 %v532
        %v578 = vunpack.c.l.b16 %v533
        %v579 = vunpack.c.h.b16 %v533
        %v580 = vunpack.c.l.b16 %v534
        %v581 = vunpack.c.h.b16 %v534
        %v582 = vunpack.c.l.b16 %v535
        %v583 = vunpack.c.h.b16 %v535
        %v584 = vpack.c.b16 %v552, %v552
        %v585 = vpack.c.b16 %v553, %v553
        %v586 = vpack.c.b16 %v554, %v554
        %v587 = vpack.c.b16 %v555, %v555
        %v588 = vpack.c.b16 %v556, %v556
        %v589 = vpack.c.b16 %v557, %v557
        %v590 = vpack.c.b16 %v558, %v558
        %v591 = vpack.c.b16 %v559, %v559
        %v592 = vpack.c.b16 %v560, %v560
        %v593 = vpack.c.b16 %v561, %v561
        %v594 = vpack.c.b16 %v562, %v562
        %v595 = vpack.c.b16 %v563, %v563
        %v596 = vpack.c.b16 %v564, %v564
        %v597 = vpack.c.b16 %v565, %v565
        %v598 = vpack.c.b16 %v566, %v566
        %v599 = vpack.c.b16 %v567, %v567
        %v600 = vpack.c.b16 %v568, %v568
        %v601 = vpack.c.b16 %v569, %v569
        %v602 = vpack.c.b16 %v570, %v570
        %v603 = vpack.c.b16 %v571, %v571
        %v604 = vpack.c.b16 %v572, %v572
        %v605 = vpack.c.b16 %v573, %v573
        %v606 = vpack.c.b16 %v574, %v574
        %v607 = vpack.c.b16 %v575, %v575
        %v608 = vpack.c.b16 %v576, %v576
        %v609 = vpack.c.b16 %v577, %v577
        %v610 = vpack.c.b16 %v578, %v578
        %v611 = vpack.c.b16 %v579, %v579
        %v612 = vpack.c.b16 %v580, %v580
        %v613 = vpack.c.b16 %v581, %v581
        %v614 = vpack.c.b16 %v582, %v582
        %v615 = vpack.c.b16 %v583, %v583
        %648 = vst [vmem:[%s219] sm:$0xf] %v584
        %649 = vst [vmem:[%s219 + $0x4] sm:$0xf] %v585
        %650 = vst [vmem:[%s219 + $0x8] sm:$0xf] %v586
        %651 = vst [vmem:[%s219 + $0xc] sm:$0xf] %v587
        %652 = vst [vmem:[%s219 + $0x10] sm:$0xf] %v588
        %653 = vst [vmem:[%s219 + $0x14] sm:$0xf] %v589
        %654 = vst [vmem:[%s219 + $0x18] sm:$0xf] %v590
        %655 = vst [vmem:[%s219 + $0x1c] sm:$0xf] %v591
        %656 = vst [vmem:[%s219 + $0x20] sm:$0xf] %v592
        %657 = vst [vmem:[%s219 + $0x24] sm:$0xf] %v593
        %658 = vst [vmem:[%s219 + $0x28] sm:$0xf] %v594
        %659 = vst [vmem:[%s219 + $0x2c] sm:$0xf] %v595
        %660 = vst [vmem:[%s219 + $0x30] sm:$0xf] %v596
        %661 = vst [vmem:[%s219 + $0x34] sm:$0xf] %v597
        %662 = vst [vmem:[%s219 + $0x38] sm:$0xf] %v598
        %663 = vst [vmem:[%s219 + $0x3c] sm:$0xf] %v599
        %664 = vst [vmem:[%s219 + $0x40] sm:$0xf] %v600
        %665 = vst [vmem:[%s219 + $0x44] sm:$0xf] %v601
        %666 = vst [vmem:[%s219 + $0x48] sm:$0xf] %v602
        %667 = vst [vmem:[%s219 + $0x4c] sm:$0xf] %v603
        %668 = vst [vmem:[%s219 + $0x50] sm:$0xf] %v604
        %669 = vst [vmem:[%s219 + $0x54] sm:$0xf] %v605
        %670 = vst [vmem:[%s219 + $0x58] sm:$0xf] %v606
        %671 = vst [vmem:[%s219 + $0x5c] sm:$0xf] %v607
        %672 = vst [vmem:[%s219 + $0x60] sm:$0xf] %v608
        %673 = vst [vmem:[%s219 + $0x64] sm:$0xf] %v609
        %674 = vst [vmem:[%s219 + $0x68] sm:$0xf] %v610
        %675 = vst [vmem:[%s219 + $0x6c] sm:$0xf] %v611
        %676 = vst [vmem:[%s219 + $0x70] sm:$0xf] %v612
        %677 = vst [vmem:[%s219 + $0x74] sm:$0xf] %v613
        %678 = vst [vmem:[%s219 + $0x78] sm:$0xf] %v614
        %679 = vst [vmem:[%s219 + $0x7c] sm:$0xf] %v615
        %v680 = vld [vmem:[%s2] sm:$0xf]
        %v681 = vld [vmem:[%s2 + $0x4] sm:$0xf]
        %v682 = vld [vmem:[%s2 + $0x8] sm:$0xf]
        %v683 = vld [vmem:[%s2 + $0xc] sm:$0xf]
        %v684 = vld [vmem:[%s2 + $0x10] sm:$0xf]
        %v685 = vld [vmem:[%s2 + $0x14] sm:$0xf]
        %v686 = vld [vmem:[%s2 + $0x18] sm:$0xf]
        %v687 = vld [vmem:[%s2 + $0x1c] sm:$0xf]
        %v688 = vld [vmem:[%s2 + $0x20] sm:$0xf]
        %v689 = vld [vmem:[%s2 + $0x24] sm:$0xf]
        %v690 = vld [vmem:[%s2 + $0x28] sm:$0xf]
        %v691 = vld [vmem:[%s2 + $0x2c] sm:$0xf]
        %v692 = vld [vmem:[%s2 + $0x30] sm:$0xf]
        %v693 = vld [vmem:[%s2 + $0x34] sm:$0xf]
        %v694 = vld [vmem:[%s2 + $0x38] sm:$0xf]
        %v695 = vld [vmem:[%s2 + $0x3c] sm:$0xf]
        %v712 = vunpack.c.l.b16 %v680
        %v713 = vunpack.c.l.b16 %v681
        %v714 = vunpack.c.l.b16 %v682
        %v715 = vunpack.c.l.b16 %v683
        %v716 = vunpack.c.l.b16 %v684
        %v717 = vunpack.c.l.b16 %v685
        %v718 = vunpack.c.l.b16 %v686
        %v719 = vunpack.c.l.b16 %v687
        %v720 = vunpack.c.l.b16 %v688
        %v721 = vunpack.c.l.b16 %v689
        %v722 = vunpack.c.l.b16 %v690
        %v723 = vunpack.c.l.b16 %v691
        %v724 = vunpack.c.l.b16 %v692
        %v725 = vunpack.c.l.b16 %v693
        %v726 = vunpack.c.l.b16 %v694
        %v727 = vunpack.c.l.b16 %v695
        %v728 = vpack.c.b16 %v713, %v712
        %v729 = vpack.c.b16 %v715, %v714
        %v730 = vpack.c.b16 %v717, %v716
        %v731 = vpack.c.b16 %v719, %v718
        %v732 = vpack.c.b16 %v721, %v720
        %v733 = vpack.c.b16 %v723, %v722
        %v734 = vpack.c.b16 %v725, %v724
        %v735 = vpack.c.b16 %v727, %v726
        %744 = vmatprep.subr.bf16.mxu0 0
        %745 = vmatpush1.bf16.msra.mxu0 %v735
        %746 = vmatprep.subr.bf16.mxu0 0
        %747 = vmatpush1.bf16.msra.mxu0 %v734
        %748 = vmatprep.subr.bf16.mxu0 0
        %749 = vmatpush1.bf16.msra.mxu0 %v733
        %750 = vmatprep.subr.bf16.mxu0 0
        %751 = vmatpush1.bf16.msra.mxu0 %v732
        %752 = vmatprep.subr.bf16.mxu0 0
        %753 = vmatpush1.bf16.msra.mxu0 %v731
        %754 = vmatprep.subr.bf16.mxu0 0
        %755 = vmatpush1.bf16.msra.mxu0 %v730
        %756 = vmatprep.subr.bf16.mxu0 0
        %757 = vmatpush1.bf16.msra.mxu0 %v729
        %758 = vmatprep.subr.bf16.mxu0 0
        %759 = vmatpush1.bf16.msra.mxu0 %v728
        %760 = vmatprep.subr.bf16.mxu0 0
        %761 = vmatpush2.bf16.msra.mxu0 0
        %762 = vmatprep.subr.bf16.mxu0 0
        %763 = vmatpush2.bf16.msra.mxu0 0
        %764 = vmatprep.subr.bf16.mxu0 0
        %765 = vmatpush2.bf16.msra.mxu0 0
        %766 = vmatprep.subr.bf16.mxu0 0
        %767 = vmatpush2.bf16.msra.mxu0 0
        %768 = vmatprep.subr.bf16.mxu0 0
        %769 = vmatpush2.bf16.msra.mxu0 0
        %770 = vmatprep.subr.bf16.mxu0 0
        %771 = vmatpush2.bf16.msra.mxu0 0
        %772 = vmatprep.subr.bf16.mxu0 0
        %773 = vmatpush2.bf16.msra.mxu0 0
        %774 = vmatprep.subr.bf16.mxu0 0
        %775 = vmatpush2.bf16.msra.mxu0 0
        %776 = vmatprep.mubr.bf16.mxu0 0
        %777 = vmatmul.mubr.bf16.gmra.mxu0 %v520
        %v778 = vpop.f32.mrf.mxu0
        %v779 = vadd.f32 0.0, %v778
        %v780 = vpop.f32.mrf.mxu0
        %v781 = vpop.f32.mrf.mxu0
        %v782 = vadd.f32 0.0, %v781
        %v783 = vpop.f32.mrf.mxu0
        %784 = vmatprep.mubr.bf16.mxu0 0
        %785 = vmatmul.mubr.bf16.gmra.mxu0 %v521
        %v786 = vpop.f32.mrf.mxu0
        %v787 = vadd.f32 0.0, %v786
        %v788 = vpop.f32.mrf.mxu0
        %v789 = vpop.f32.mrf.mxu0
        %v790 = vadd.f32 0.0, %v789
        %v791 = vpop.f32.mrf.mxu0
        %792 = vmatprep.mubr.bf16.mxu0 0
        %793 = vmatmul.mubr.bf16.gmra.mxu0 %v522
        %v794 = vpop.f32.mrf.mxu0
        %v795 = vadd.f32 0.0, %v794
        %v796 = vpop.f32.mrf.mxu0
        %v797 = vpop.f32.mrf.mxu0
        %v798 = vadd.f32 0.0, %v797
        %v799 = vpop.f32.mrf.mxu0
        %800 = vmatprep.mubr.bf16.mxu0 0
        %801 = vmatmul.mubr.bf16.gmra.mxu0 %v523
        %v802 = vpop.f32.mrf.mxu0
        %v803 = vadd.f32 0.0, %v802
        %v804 = vpop.f32.mrf.mxu0
        %v805 = vpop.f32.mrf.mxu0
        %v806 = vadd.f32 0.0, %v805
        %v807 = vpop.f32.mrf.mxu0
        %808 = vmatprep.mubr.bf16.mxu0 0
        %809 = vmatmul.mubr.bf16.gmra.mxu0 %v524
        %v810 = vpop.f32.mrf.mxu0
        %v811 = vadd.f32 0.0, %v810
        %v812 = vpop.f32.mrf.mxu0
        %v813 = vpop.f32.mrf.mxu0
        %v814 = vadd.f32 0.0, %v813
        %v815 = vpop.f32.mrf.mxu0
        %816 = vmatprep.mubr.bf16.mxu0 0
        %817 = vmatmul.mubr.bf16.gmra.mxu0 %v525
        %v818 = vpop.f32.mrf.mxu0
        %v819 = vadd.f32 0.0, %v818
        %v820 = vpop.f32.mrf.mxu0
        %v821 = vpop.f32.mrf.mxu0
        %v822 = vadd.f32 0.0, %v821
        %v823 = vpop.f32.mrf.mxu0
        %824 = vmatprep.mubr.bf16.mxu0 0
        %825 = vmatmul.mubr.bf16.gmra.mxu0 %v526
        %v826 = vpop.f32.mrf.mxu0
        %v827 = vadd.f32 0.0, %v826
        %v828 = vpop.f32.mrf.mxu0
        %v829 = vpop.f32.mrf.mxu0
        %v830 = vadd.f32 0.0, %v829
        %v831 = vpop.f32.mrf.mxu0
        %832 = vmatprep.mubr.bf16.mxu0 0
        %833 = vmatmul.mubr.bf16.gmra.mxu0 %v527
        %v834 = vpop.f32.mrf.mxu0
        %v835 = vadd.f32 0.0, %v834
        %v836 = vpop.f32.mrf.mxu0
        %v837 = vpop.f32.mrf.mxu0
        %v838 = vadd.f32 0.0, %v837
        %v839 = vpop.f32.mrf.mxu0
        %840 = vmatprep.mubr.bf16.mxu0 0
        %841 = vmatmul.mubr.bf16.gmra.mxu0 %v528
        %v842 = vpop.f32.mrf.mxu0
        %v843 = vadd.f32 0.0, %v842
        %v844 = vpop.f32.mrf.mxu0
        %v845 = vpop.f32.mrf.mxu0
        %v846 = vadd.f32 0.0, %v845
        %v847 = vpop.f32.mrf.mxu0
        %848 = vmatprep.mubr.bf16.mxu0 0
        %849 = vmatmul.mubr.bf16.gmra.mxu0 %v529
        %v850 = vpop.f32.mrf.mxu0
        %v851 = vadd.f32 0.0, %v850
        %v852 = vpop.f32.mrf.mxu0
        %v853 = vpop.f32.mrf.mxu0
        %v854 = vadd.f32 0.0, %v853
        %v855 = vpop.f32.mrf.mxu0
        %856 = vmatprep.mubr.bf16.mxu0 0
        %857 = vmatmul.mubr.bf16.gmra.mxu0 %v530
        %v858 = vpop.f32.mrf.mxu0
        %v859 = vadd.f32 0.0, %v858
        %v860 = vpop.f32.mrf.mxu0
        %v861 = vpop.f32.mrf.mxu0
        %v862 = vadd.f32 0.0, %v861
        %v863 = vpop.f32.mrf.mxu0
        %864 = vmatprep.mubr.bf16.mxu0 0
        %865 = vmatmul.mubr.bf16.gmra.mxu0 %v531
        %v866 = vpop.f32.mrf.mxu0
        %v867 = vadd.f32 0.0, %v866
        %v868 = vpop.f32.mrf.mxu0
        %v869 = vpop.f32.mrf.mxu0
        %v870 = vadd.f32 0.0, %v869
        %v871 = vpop.f32.mrf.mxu0
        %872 = vmatprep.mubr.bf16.mxu0 0
        %873 = vmatmul.mubr.bf16.gmra.mxu0 %v532
        %v874 = vpop.f32.mrf.mxu0
        %v875 = vadd.f32 0.0, %v874
        %v876 = vpop.f32.mrf.mxu0
        %v877 = vpop.f32.mrf.mxu0
        %v878 = vadd.f32 0.0, %v877
        %v879 = vpop.f32.mrf.mxu0
        %880 = vmatprep.mubr.bf16.mxu0 0
        %881 = vmatmul.mubr.bf16.gmra.mxu0 %v533
        %v882 = vpop.f32.mrf.mxu0
        %v883 = vadd.f32 0.0, %v882
        %v884 = vpop.f32.mrf.mxu0
        %v885 = vpop.f32.mrf.mxu0
        %v886 = vadd.f32 0.0, %v885
        %v887 = vpop.f32.mrf.mxu0
        %888 = vmatprep.mubr.bf16.mxu0 0
        %889 = vmatmul.mubr.bf16.gmra.mxu0 %v534
        %v890 = vpop.f32.mrf.mxu0
        %v891 = vadd.f32 0.0, %v890
        %v892 = vpop.f32.mrf.mxu0
        %v893 = vpop.f32.mrf.mxu0
        %v894 = vadd.f32 0.0, %v893
        %v895 = vpop.f32.mrf.mxu0
        %896 = vmatprep.mubr.bf16.mxu0 0
        %897 = vmatmul.mubr.bf16.gmra.mxu0 %v535
        %v898 = vpop.f32.mrf.mxu0
        %v899 = vadd.f32 0.0, %v898
        %v900 = vpop.f32.mrf.mxu0
        %v901 = vpop.f32.mrf.mxu0
        %v902 = vadd.f32 0.0, %v901
        %v903 = vpop.f32.mrf.mxu0
        %904 = vdwg.mxu0
        %vm905 = vcmask 64512
        %906 = vst.msk [vmem:[%s245] sm:$0xff] %vm905, %v779
        %907 = vst.msk [vmem:[%s245 + $0x8] sm:$0xff] %vm905, %v782
        %908 = vst.msk [vmem:[%s245 + $0x10] sm:$0xff] %vm905, %v787
        %909 = vst.msk [vmem:[%s245 + $0x18] sm:$0xff] %vm905, %v790
        %910 = vst.msk [vmem:[%s245 + $0x20] sm:$0xff] %vm905, %v795
        %911 = vst.msk [vmem:[%s245 + $0x28] sm:$0xff] %vm905, %v798
        %912 = vst.msk [vmem:[%s245 + $0x30] sm:$0xff] %vm905, %v803
        %913 = vst.msk [vmem:[%s245 + $0x38] sm:$0xff] %vm905, %v806
        %914 = vst.msk [vmem:[%s245 + $0x40] sm:$0xff] %vm905, %v811
        %915 = vst.msk [vmem:[%s245 + $0x48] sm:$0xff] %vm905, %v814
        %916 = vst.msk [vmem:[%s245 + $0x50] sm:$0xff] %vm905, %v819
        %917 = vst.msk [vmem:[%s245 + $0x58] sm:$0xff] %vm905, %v822
        %918 = vst.msk [vmem:[%s245 + $0x60] sm:$0xff] %vm905, %v827
        %919 = vst.msk [vmem:[%s245 + $0x68] sm:$0xff] %vm905, %v830
        %920 = vst.msk [vmem:[%s245 + $0x70] sm:$0xff] %vm905, %v835
        %921 = vst.msk [vmem:[%s245 + $0x78] sm:$0xff] %vm905, %v838
        %922 = vst.msk [vmem:[%s245 + $0x80] sm:$0xff] %vm905, %v843
        %923 = vst.msk [vmem:[%s245 + $0x88] sm:$0xff] %vm905, %v846
        %924 = vst.msk [vmem:[%s245 + $0x90] sm:$0xff] %vm905, %v851
        %925 = vst.msk [vmem:[%s245 + $0x98] sm:$0xff] %vm905, %v854
        %926 = vst.msk [vmem:[%s245 + $0xa0] sm:$0xff] %vm905, %v859
        %927 = vst.msk [vmem:[%s245 + $0xa8] sm:$0xff] %vm905, %v862
        %928 = vst.msk [vmem:[%s245 + $0xb0] sm:$0xff] %vm905, %v867
        %929 = vst.msk [vmem:[%s245 + $0xb8] sm:$0xff] %vm905, %v870
        %930 = vst.msk [vmem:[%s245 + $0xc0] sm:$0xff] %vm905, %v875
        %931 = vst.msk [vmem:[%s245 + $0xc8] sm:$0xff] %vm905, %v878
        %932 = vst.msk [vmem:[%s245 + $0xd0] sm:$0xff] %vm905, %v883
        %933 = vst.msk [vmem:[%s245 + $0xd8] sm:$0xff] %vm905, %v886
        %934 = vst.msk [vmem:[%s245 + $0xe0] sm:$0xff] %vm905, %v891
        %935 = vst.msk [vmem:[%s245 + $0xe8] sm:$0xff] %vm905, %v894
        %936 = vst.msk [vmem:[%s245 + $0xf0] sm:$0xff] %vm905, %v899
        %937 = vst.msk [vmem:[%s245 + $0xf8] sm:$0xff] %vm905, %v902
        %970 = vrot.lane.b32.xlu0 %v779, 120
        %v971 = vpop.permute.xlu0 %970
        %972 = vrot.lane.b32.xlu0 %v782, 120
        %v973 = vpop.permute.xlu0 %972
        %974 = vrot.lane.b32.xlu0 %v787, 120
        %v975 = vpop.permute.xlu0 %974
        %976 = vrot.lane.b32.xlu0 %v790, 120
        %v977 = vpop.permute.xlu0 %976
        %978 = vrot.lane.b32.xlu0 %v795, 120
        %v979 = vpop.permute.xlu0 %978
        %980 = vrot.lane.b32.xlu0 %v798, 120
        %v981 = vpop.permute.xlu0 %980
        %982 = vrot.lane.b32.xlu0 %v803, 120
        %v983 = vpop.permute.xlu0 %982
        %984 = vrot.lane.b32.xlu0 %v806, 120
        %v985 = vpop.permute.xlu0 %984
        %986 = vrot.lane.b32.xlu0 %v811, 120
        %v987 = vpop.permute.xlu0 %986
        %988 = vrot.lane.b32.xlu0 %v814, 120
        %v989 = vpop.permute.xlu0 %988
        %990 = vrot.lane.b32.xlu0 %v819, 120
        %v991 = vpop.permute.xlu0 %990
        %992 = vrot.lane.b32.xlu0 %v822, 120
        %v993 = vpop.permute.xlu0 %992
        %994 = vrot.lane.b32.xlu0 %v827, 120
        %v995 = vpop.permute.xlu0 %994
        %996 = vrot.lane.b32.xlu0 %v830, 120
        %v997 = vpop.permute.xlu0 %996
        %998 = vrot.lane.b32.xlu0 %v835, 120
        %v999 = vpop.permute.xlu0 %998
        %1000 = vrot.lane.b32.xlu0 %v838, 120
        %v1001 = vpop.permute.xlu0 %1000
        %1002 = vrot.lane.b32.xlu0 %v843, 120
        %v1003 = vpop.permute.xlu0 %1002
        %1004 = vrot.lane.b32.xlu0 %v846, 120
        %v1005 = vpop.permute.xlu0 %1004
        %1006 = vrot.lane.b32.xlu0 %v851, 120
        %v1007 = vpop.permute.xlu0 %1006
        %1008 = vrot.lane.b32.xlu0 %v854, 120
        %v1009 = vpop.permute.xlu0 %1008
        %1010 = vrot.lane.b32.xlu0 %v859, 120
        %v1011 = vpop.permute.xlu0 %1010
        %1012 = vrot.lane.b32.xlu0 %v862, 120
        %v1013 = vpop.permute.xlu0 %1012
        %1014 = vrot.lane.b32.xlu0 %v867, 120
        %v1015 = vpop.permute.xlu0 %1014
        %1016 = vrot.lane.b32.xlu0 %v870, 120
        %v1017 = vpop.permute.xlu0 %1016
        %1018 = vrot.lane.b32.xlu0 %v875, 120
        %v1019 = vpop.permute.xlu0 %1018
        %1020 = vrot.lane.b32.xlu0 %v878, 120
        %v1021 = vpop.permute.xlu0 %1020
        %1022 = vrot.lane.b32.xlu0 %v883, 120
        %v1023 = vpop.permute.xlu0 %1022
        %1024 = vrot.lane.b32.xlu0 %v886, 120
        %v1025 = vpop.permute.xlu0 %1024
        %1026 = vrot.lane.b32.xlu0 %v891, 120
        %v1027 = vpop.permute.xlu0 %1026
        %1028 = vrot.lane.b32.xlu0 %v894, 120
        %v1029 = vpop.permute.xlu0 %1028
        %1030 = vrot.lane.b32.xlu0 %v899, 120
        %v1031 = vpop.permute.xlu0 %1030
        %1032 = vrot.lane.b32.xlu0 %v902, 120
        %v1033 = vpop.permute.xlu0 %1032
        %1066 = vst.msk [vmem:[%s251] sm:$0xff] %vm905, %v971
        %1067 = vst.msk [vmem:[%s251 + $0x8] sm:$0xff] %vm905, %v973
        %1068 = vst.msk [vmem:[%s251 + $0x10] sm:$0xff] %vm905, %v975
        %1069 = vst.msk [vmem:[%s251 + $0x18] sm:$0xff] %vm905, %v977
        %1070 = vst.msk [vmem:[%s251 + $0x20] sm:$0xff] %vm905, %v979
        %1071 = vst.msk [vmem:[%s251 + $0x28] sm:$0xff] %vm905, %v981
        %1072 = vst.msk [vmem:[%s251 + $0x30] sm:$0xff] %vm905, %v983
        %1073 = vst.msk [vmem:[%s251 + $0x38] sm:$0xff] %vm905, %v985
        %1074 = vst.msk [vmem:[%s251 + $0x40] sm:$0xff] %vm905, %v987
        %1075 = vst.msk [vmem:[%s251 + $0x48] sm:$0xff] %vm905, %v989
        %1076 = vst.msk [vmem:[%s251 + $0x50] sm:$0xff] %vm905, %v991
        %1077 = vst.msk [vmem:[%s251 + $0x58] sm:$0xff] %vm905, %v993
        %1078 = vst.msk [vmem:[%s251 + $0x60] sm:$0xff] %vm905, %v995
        %1079 = vst.msk [vmem:[%s251 + $0x68] sm:$0xff] %vm905, %v997
        %1080 = vst.msk [vmem:[%s251 + $0x70] sm:$0xff] %vm905, %v999
        %1081 = vst.msk [vmem:[%s251 + $0x78] sm:$0xff] %vm905, %v1001
        %1082 = vst.msk [vmem:[%s251 + $0x80] sm:$0xff] %vm905, %v1003
        %1083 = vst.msk [vmem:[%s251 + $0x88] sm:$0xff] %vm905, %v1005
        %1084 = vst.msk [vmem:[%s251 + $0x90] sm:$0xff] %vm905, %v1007
        %1085 = vst.msk [vmem:[%s251 + $0x98] sm:$0xff] %vm905, %v1009
        %1086 = vst.msk [vmem:[%s251 + $0xa0] sm:$0xff] %vm905, %v1011
        %1087 = vst.msk [vmem:[%s251 + $0xa8] sm:$0xff] %vm905, %v1013
        %1088 = vst.msk [vmem:[%s251 + $0xb0] sm:$0xff] %vm905, %v1015
        %1089 = vst.msk [vmem:[%s251 + $0xb8] sm:$0xff] %vm905, %v1017
        %1090 = vst.msk [vmem:[%s251 + $0xc0] sm:$0xff] %vm905, %v1019
        %1091 = vst.msk [vmem:[%s251 + $0xc8] sm:$0xff] %vm905, %v1021
        %1092 = vst.msk [vmem:[%s251 + $0xd0] sm:$0xff] %vm905, %v1023
        %1093 = vst.msk [vmem:[%s251 + $0xd8] sm:$0xff] %vm905, %v1025
        %1094 = vst.msk [vmem:[%s251 + $0xe0] sm:$0xff] %vm905, %v1027
        %1095 = vst.msk [vmem:[%s251 + $0xe8] sm:$0xff] %vm905, %v1029
        %1096 = vst.msk [vmem:[%s251 + $0xf0] sm:$0xff] %vm905, %v1031
        %1097 = vst.msk [vmem:[%s251 + $0xf8] sm:$0xff] %vm905, %v1033
        %s1098 = sand.u32 %s96, 1
        %s1099 = scalar_lea.sflag [#allocation3], %s1098
        %s1100 = sand.u32 %s96, 1
        %s1101 = smul.addr %s1100, 128
        %s1102 = scalar_lea.vmem [#allocation2], %s1101
        %s1103 = smul.u32 32, %s20
        %p1104 = scmp.lt.s32.totalorder %s1103, 63
        %s1105 = scalar_select %p1104, %s1103, 63
        %s1106 = smul.addr %s1105, 8
        %s1107 = scalar_lea.vmem %s4, %s1106
        %s1108 = smul.u32 32, %s20
        %p1109 = scmp.lt.s32.totalorder %s1108, 63
        %s1110 = scalar_select %p1109, %s1108, 63
        %s1111 = smul.addr %s1110, 8
        %s1112 = scalar_lea.vmem %s5, %s1111
        // Predicated region
        $region33: #{tpu_custom_call.1} parent=31 // pred_check
          %p1113 = pneg %p106
        $region34: #{tpu_custom_call.1} parent=31 // pred_check_branch
          %1115 = sbr.rel (%p1113) target = $region36
        $region35: #{tpu_custom_call.1} parent=31 // pred_region
          %s1116 = smul.u32 32, %s20
          %s1118 = ssub.s32 2048, 2048
          %1119 = vsyncadd %s1099, %s1118
          %s1120 = smul.addr %s1116, 64
          %s1121 = scalar_lea.hbm %s3, %s1120
          %s1122 = sshll.u32 %s1102, 4
          %s1123 = int_to_ptr.vmem [resolvable:$true] %s1122
          %1128 = dma.vmem_to_hbm [thread:$0]  %s1123, 2048, %s1121, %s1099, 64, 64, 4
        $region36: #{tpu_custom_call.1} parent=31 // pred_fallthru
          _
        // Predicated region
        $region37: #{tpu_custom_call.1} parent=31 // pred_check
          %p1129 = pneg %p132
        $region38: #{tpu_custom_call.1} parent=31 // pred_check_branch
          %1131 = sbr.rel (%p1129) target = $region40
        $region39: #{tpu_custom_call.1} parent=31 // pred_region
          %s1132 = smul.u32 32, %s20
        $region40: #{tpu_custom_call.1} parent=31 // pred_fallthru
          _
        // Predicated region
        $region41: #{tpu_custom_call.1} parent=31 // pred_check
          %p1133 = pneg %p158
        $region42: #{tpu_custom_call.1} parent=31 // pred_check_branch
          %1135 = sbr.rel (%p1133) target = $region44
        $region43: #{tpu_custom_call.1} parent=31 // pred_region
          %s1136 = smul.u32 32, %s20
        $region44: #{tpu_custom_call.1} parent=31 // pred_fallthru
          _
      $region32: #{tpu_custom_call.1} parent=5 // pred_fallthru
        _
      %p1137 = scmp.le.s32.totalorder 2, %s15
      // Predicated region
      $region45: #{tpu_custom_call.1} parent=5 // pred_check
        %p1138 = pneg %p1137
      $region46: #{tpu_custom_call.1} parent=5 // pred_check_branch
        %1140 = sbr.rel (%p1138) target = $region48
      $region47: #{tpu_custom_call.1} parent=5 // pred_region
        %s1141 = ssub.s32 %s15, 2
        // Predicated region
        $region49: #{tpu_custom_call.1} parent=47 // pred_check
          %p1142 = pneg %p112
        $region50: #{tpu_custom_call.1} parent=47 // pred_check_branch
          %1144 = sbr.rel (%p1142) target = $region52
        $region51: #{tpu_custom_call.1} parent=47 // pred_region
          %s1145 = sand.u32 %s97, 1
          %s1146 = scalar_lea.sflag [#allocation3], %s1145
          %s1147 = sand.u32 %s97, 1
          %s1148 = smul.addr %s1147, 128
          %s1149 = scalar_lea.vmem [#allocation2], %s1148
          %1150 = dma.done %s1146, 2048
        $region52: #{tpu_custom_call.1} parent=47 // pred_fallthru
          _
        // Predicated region
        $region53: #{tpu_custom_call.1} parent=47 // pred_check
          %p1151 = pneg %p138
        $region54: #{tpu_custom_call.1} parent=47 // pred_check_branch
          %1153 = sbr.rel (%p1151) target = $region56
        $region55: #{tpu_custom_call.1} parent=47 // pred_region
          %s1154 = smul.u32 32, %s21
          %p1155 = scmp.lt.s32.totalorder %s1154, 63
          %s1156 = scalar_select %p1155, %s1154, 63
          %s1157 = smul.addr %s1156, 8
          %s1158 = scalar_lea.vmem %s4, %s1157
        $region56: #{tpu_custom_call.1} parent=47 // pred_fallthru
          _
        // Predicated region
        $region57: #{tpu_custom_call.1} parent=47 // pred_check
          %p1159 = pneg %p164
        $region58: #{tpu_custom_call.1} parent=47 // pred_check_branch
          %1161 = sbr.rel (%p1159) target = $region60
        $region59: #{tpu_custom_call.1} parent=47 // pred_region
          %s1162 = smul.u32 32, %s21
          %p1163 = scmp.lt.s32.totalorder %s1162, 63
          %s1164 = scalar_select %p1163, %s1162, 63
          %s1165 = smul.addr %s1164, 8
          %s1166 = scalar_lea.vmem %s5, %s1165
        $region60: #{tpu_custom_call.1} parent=47 // pred_fallthru
          _
      $region48: #{tpu_custom_call.1} parent=5 // pred_fallthru
        _
    $region6: #{tpu_custom_call.1} parent=1 // loop_footer
      %s19 = sadd.s32 1, %s15
    $region7: #{tpu_custom_call.1} parent=1 // loop_footer_branch
      %14 = sbr.rel target = $region3
    $region8: #{tpu_custom_call.1} parent=1 // loop_exit
      _
    %1167 = vsyncpa [#allocation3], 1
    %s1168 = scalar_lea.sflag [#allocation3], 1
    %1169 = vsyncpa %s1168, 1

</llo_original>
